<compile_context>
chip_gen: v7x
topology: tpu7x:2x2x1
jax: 0.10.0
libtpu: 0.0.40
codegen_flags: <defaults>
</compile_context>

<pallas_src>
import functools

import numpy as np
import jax
import jax.numpy as jnp
from jax import lax
from jax.experimental import pallas as pl
from jax.experimental.pallas import tpu as pltpu


def _round_up(x, m):
    return ((x + m - 1) // m) * m


def _pick_r_tile(requested, R, e_pad, b_tile, vmem_budget_bytes=24 << 20):
    """Cap the R tile so double-buffered bf16 Gt tiles + the resident
    accumulator / Ut / It blocks fit a conservative VMEM budget.

    The default budget is sized for v7x (64 MiB physical VMEM, 32 MiB scoped
    default); on v5e/v6e (128 MiB VMEM) pass a larger budget (and raise
    pltpu.CompilerParams(vmem_limit_bytes=...)) to amortize the ~0.35 us
    per-grid-step overhead over bigger G chunks.
    """
    resident = 4 * (e_pad * b_tile * 4) + 8 * b_tile * 4     # acc, Ut, It (+ slack), f32
    per_r = 2 * (2 * e_pad + 4)                              # 2x-buffered bf16 Gt col + i32 ru
    fits = max(128, (vmem_budget_bytes - resident) // per_r)
    r_tile = min(int(requested), int(fits), _round_up(R, 128))
    return max(128, 128 * (r_tile // 128))


def svdpp_kernel(mean_ref, u_ref, ru_ref, gt_ref, ut_ref, it_ref,
                 bu_ref, bi_ref, out_ref, acc_ref, *, ones_row):
    k = pl.program_id(1)

    # --- init the per-B-tile accumulator on the first R tile ----------------
    @pl.when(k == 0)
    def _():
        acc_ref[...] = jnp.zeros_like(acc_ref)

    # --- membership mask (transposed): mask[r, b] = 1 iff rating r belongs to
    #     the user of batch lane b.  Exactly representable in bf16.
    maskT = (ru_ref[...] == u_ref[0]).astype(jnp.bfloat16)          # (R_TILE, B_TILE)

    # --- masked sum of implicit item embeddings as one bf16 MXU matmul with
    #     f32 accumulation.  Row `ones_row` of Gt is all ones, so
    #     acc[ones_row, b] accumulates |N(u_b)| for free.
    acc_ref[...] += jnp.dot(gt_ref[...], maskT,
                            preferred_element_type=jnp.float32)     # (E_pad, B_TILE)

    # --- finalize on the last R tile ----------------------------------------
    @pl.when(k == pl.num_programs(1) - 1)
    def _():
        acc = acc_ref[...]                                           # (E_pad, B_TILE) f32
        counts = acc[ones_row:ones_row + 1, :]                       # (1, B_TILE)
        # |N(u)|^(-1/2), 0 for users with no ratings (ZeroDivisionError branch).
        n1 = jnp.where(counts > 0.0, lax.rsqrt(counts), 0.0)
        # Rows >= emb_size of It are zero padding, so the count row's
        # contribution to `implicit` is multiplied away.
        x = it_ref[...] * (ut_ref[...] + n1 * acc)                   # (E_pad, B_TILE)
        pred = jnp.sum(x, axis=0, keepdims=True)                     # (1, B_TILE)
        out_ref[0] = pred + bu_ref[0] + bi_ref[0] + mean_ref[0, 0]


def svdpp_forward(u, v, params, rating_users, rating_items, *,
                  b_tile=128, r_tile=2048):
    """u, v: (B,) int32 user / item ids.  Returns (B,) f32 predictions."""
    user_emb, user_bias, item_emb, item_bias, item_impl, mean = params
    B = int(u.shape[0])
    R = int(rating_users.shape[0])
    E = int(user_emb.shape[1])
    f32 = jnp.float32

    ones_row = E                                   # counts row lives in the E padding
    e_pad = _round_up(E + 1, 8)
    b_tile = _round_up(max(b_tile, 128), 128)      # lane-dense B tile (>= 128 lanes)
    B_pad = _round_up(B, b_tile)
    n_b = B_pad // b_tile
    r_tile = _pick_r_tile(r_tile, R, e_pad, b_tile)
    R_pad = _round_up(R, r_tile)
    n_r = R_pad // r_tile

    # ---- JAX glue: gathers + transpose/pad into lane-dense layouts ---------
    # TODO(synk): for production-sized R, fuse this gather into the kernel
    # (scalar-prefetched rating_items + manual DMA), or pre-sort ratings per
    # user and use a PrefetchScalarGridSpec-driven sparse gather instead of
    # the dense (R_TILE, B_TILE) membership mask.
    Gt = jnp.zeros((e_pad, R_pad), f32)
    Gt = Gt.at[:E, :R].set(item_impl.astype(f32)[rating_items].T)
    Gt = Gt.at[ones_row, :R].set(1.0)              # counts fall out of the matmul
    Gt = Gt.astype(jnp.bfloat16)                   # MXU-native operand dtype

    Ut = jnp.zeros((e_pad, B_pad), f32).at[:E, :B].set(user_emb.astype(f32)[u].T)
    It = jnp.zeros((e_pad, B_pad), f32).at[:E, :B].set(item_emb.astype(f32)[v].T)

    u_ids = jnp.full((B_pad,), -1, jnp.int32).at[:B].set(u.astype(jnp.int32))
    u_ids = u_ids.reshape(n_b, 1, b_tile)
    ru = jnp.full((R_pad,), -1, jnp.int32).at[:R].set(rating_users.astype(jnp.int32))
    ru = ru.reshape(R_pad, 1)

    bu = jnp.zeros((B_pad,), f32).at[:B].set(user_bias.astype(f32)[u][:, 0])
    bu = bu.reshape(n_b, 1, b_tile)
    bi = jnp.zeros((B_pad,), f32).at[:B].set(item_bias.astype(f32)[v][:, 0])
    bi = bi.reshape(n_b, 1, b_tile)

    mean_arr = jnp.asarray(mean, f32).reshape(1, 1)

    out = pl.pallas_call(
        functools.partial(svdpp_kernel, ones_row=ones_row),
        out_shape=jax.ShapeDtypeStruct((n_b, 1, b_tile), f32),
        grid_spec=pltpu.PrefetchScalarGridSpec(
            num_scalar_prefetch=0,
            grid=(n_b, n_r),                                          # reduction axis last
            in_specs=[
                pl.BlockSpec(memory_space=pltpu.MemorySpace.SMEM),        # mean
                pl.BlockSpec((1, 1, b_tile), lambda i, k: (i, 0, 0)),     # u ids (lanes)
                pl.BlockSpec((r_tile, 1), lambda i, k: (k, 0)),           # rating users
                pl.BlockSpec((e_pad, r_tile), lambda i, k: (0, k)),       # Gt (bf16)
                pl.BlockSpec((e_pad, b_tile), lambda i, k: (0, i)),       # Ut
                pl.BlockSpec((e_pad, b_tile), lambda i, k: (0, i)),       # It
                pl.BlockSpec((1, 1, b_tile), lambda i, k: (i, 0, 0)),     # b_u
                pl.BlockSpec((1, 1, b_tile), lambda i, k: (i, 0, 0)),     # b_i
            ],
            out_specs=pl.BlockSpec((1, 1, b_tile), lambda i, k: (i, 0, 0)),
            scratch_shapes=[pltpu.VMEM((e_pad, b_tile), jnp.float32)],
        ),
        compiler_params=pltpu.CompilerParams(
            dimension_semantics=("parallel", "arbitrary")),
    )(mean_arr, u_ids, ru, Gt, Ut, It, bu, bi)

    return out.reshape(-1)[:B]


def svdpp_reference(u, v, params, rating_users, rating_items):
    """Pure-JAX f32 reference mirroring the PyTorch loop semantics."""
    user_emb, user_bias, item_emb, item_bias, item_impl, mean = params
    U = user_emb[u]
    I = item_emb[v]
    b_u = user_bias[u][:, 0]
    b_i = item_bias[v][:, 0]
    G = item_impl[rating_items]                                    # (R, E)
    mask = (u[:, None] == rating_users[None, :]).astype(jnp.float32)
    counts = mask.sum(axis=1, keepdims=True)
    n1 = jnp.where(counts > 0, counts ** -0.5, 0.0)
    implicit = n1 * (mask @ G)
    return (I * (U + implicit)).sum(axis=1) + b_u + b_i + mean


if __name__ == "__main__":
    # Small, deterministic synthetic setup (matches the module's __init__).
    # Shapes chosen to exercise multi-tile B (B > 128), multi-tile R, and
    # padding on both axes.
    num_users, num_items, emb_size = 16, 64, 32
    B = 136            # batch of (user, item) queries -> 2 B-tiles of 128
    R = 300            # rating pairs -> 3 R-tiles of 128 (with padding)
    mean_rating = 3.5

    key = jax.random.PRNGKey(0)
    k = jax.random.split(key, 8)

    user_emb = jax.random.uniform(k[0], (num_users, emb_size), jnp.float32, 0.0, 0.005)
    user_bias = jax.random.uniform(k[1], (num_users, 1), jnp.float32, -0.01, 0.01)
    item_emb = jax.random.uniform(k[2], (num_items, emb_size), jnp.float32, 0.0, 0.005)
    item_bias = jax.random.uniform(k[3], (num_items, 1), jnp.float32, -0.01, 0.01)
    item_impl = jax.random.uniform(k[4], (num_items, emb_size), jnp.float32, -0.01, 0.01)
    params = (user_emb, user_bias, item_emb, item_bias, item_impl,
              jnp.float32(mean_rating))

    # ratingidx: R rating pairs (user_id, item_id); row 0 = users, row 1 = items.
    rating_users = jax.random.randint(k[5], (R,), 0, num_users, jnp.int32)
    rating_items = jax.random.randint(k[6], (R,), 0, num_items, jnp.int32)

    # batch of queries
    u = jax.random.randint(k[7], (B,), 0, num_users, jnp.int32)
    v = jax.random.randint(jax.random.fold_in(key, 99), (B,), 0, num_items, jnp.int32)

    out = jax.block_until_ready(
        svdpp_forward(u, v, params, rating_users, rating_items, r_tile=128))
    ref = jax.block_until_ready(
        svdpp_reference(u, v, params, rating_users, rating_items))

    # Tolerance covers the bf16 quantization of G (error << 1e-4 at these
    # magnitudes) and rsqrt-vs-pow ulp differences.
    np.testing.assert_allclose(np.asarray(out), np.asarray(ref),
                               rtol=1e-4, atol=1e-4)
    print("KERNEL_OK")
</pallas_src>

<mosaic_0001>
module attributes {stable_mosaic.version = 11 : i64} {
  func.func @svdpp_kernel(%arg0: i32, %arg1: i32, %arg2: memref<1x1xf32, #tpu.memory_space<smem>>, %arg3: memref<1x1x128xi32, #tpu.memory_space<vmem>>, %arg4: memref<128x1xi32, #tpu.memory_space<vmem>>, %arg5: memref<40x128xbf16, #tpu.memory_space<vmem>>, %arg6: memref<40x128xf32, #tpu.memory_space<vmem>>, %arg7: memref<40x128xf32, #tpu.memory_space<vmem>>, %arg8: memref<1x1x128xf32, #tpu.memory_space<vmem>>, %arg9: memref<1x1x128xf32, #tpu.memory_space<vmem>>, %arg10: memref<1x1x128xf32, #tpu.memory_space<vmem>>, %arg11: memref<40x128xf32, #tpu.memory_space<vmem>>) attributes {dimension_semantics = [#tpu.dimension_semantics<parallel>, #tpu.dimension_semantics<arbitrary>], iteration_bounds = array<i64: 2, 3>, scalar_prefetch = 0 : i64, scratch_operands = 1 : i64, tpu.core_type = #tpu.core_type<tc>, window_params = [{transform_indices = @transform_0, window_bounds = array<i64: 1, 1>}, {transform_indices = @transform_1, window_bounds = array<i64: 1, 1, 128>}, {transform_indices = @transform_2, window_bounds = array<i64: 128, 1>}, {transform_indices = @transform_3, window_bounds = array<i64: 40, 128>}, {transform_indices = @transform_4, window_bounds = array<i64: 40, 128>}, {transform_indices = @transform_5, window_bounds = array<i64: 40, 128>}, {transform_indices = @transform_6, window_bounds = array<i64: 1, 1, 128>}, {transform_indices = @transform_7, window_bounds = array<i64: 1, 1, 128>}, {transform_indices = @transform_8, window_bounds = array<i64: 1, 1, 128>}]} {
    %c0_i32 = arith.constant 0 : i32
    %0 = arith.cmpi eq, %arg1, %c0_i32 : i32
    %1 = arith.extui %0 : i1 to i32
    %c0_i32_0 = arith.constant 0 : i32
    %2 = arith.cmpi ne, %1, %c0_i32_0 : i32
    scf.if %2 {
      %cst_12 = arith.constant 0.000000e+00 : f32
      %20 = vector.broadcast %cst_12 : f32 to vector<40x128xf32>
      %c0_13 = arith.constant 0 : index
      %c0_14 = arith.constant 0 : index
      %21 = vector.load %arg11[%c0_13, %c0_14] : memref<40x128xf32, #tpu.memory_space<vmem>>, vector<40x128xf32>
      tpu.vector_store %arg11[%c0_13, %c0_14], %20 {strides = array<i32>} : memref<40x128xf32, #tpu.memory_space<vmem>>, vector<40x128xf32>,
    } else {
    }
    %c0 = arith.constant 0 : index
    %c0_1 = arith.constant 0 : index
    %3 = vector.load %arg4[%c0, %c0_1] : memref<128x1xi32, #tpu.memory_space<vmem>>, vector<128x1xi32>
    %c0_2 = arith.constant 0 : index
    %c0_3 = arith.constant 0 : index
    %c0_4 = arith.constant 0 : index
    %4 = vector.load %arg3[%c0_2, %c0_3, %c0_4] : memref<1x1x128xi32, #tpu.memory_space<vmem>>, vector<1x1x128xi32>
    %5 = vector.shape_cast %4 : vector<1x1x128xi32> to vector<1x128xi32>
    %6 = vector.broadcast %3 : vector<128x1xi32> to vector<128x128xi32>
    %7 = vector.broadcast %5 : vector<1x128xi32> to vector<128x128xi32>
    %8 = arith.cmpi eq, %6, %7 : vector<128x128xi32>
    %9 = arith.extui %8 : vector<128x128xi1> to vector<128x128xi32>
    %10 = arith.sitofp %9 : vector<128x128xi32> to vector<128x128xf32>
    %11 = arith.truncf %10 : vector<128x128xf32> to vector<128x128xbf16>
    %c0_5 = arith.constant 0 : index
    %c0_6 = arith.constant 0 : index
    %12 = vector.load %arg11[%c0_5, %c0_6] : memref<40x128xf32, #tpu.memory_space<vmem>>, vector<40x128xf32>
    %c0_7 = arith.constant 0 : index
    %c0_8 = arith.constant 0 : index
    %13 = vector.load %arg5[%c0_7, %c0_8] : memref<40x128xbf16, #tpu.memory_space<vmem>>, vector<40x128xbf16>
    %cst = arith.constant dense<0.000000e+00> : vector<40x128xf32>
    %14 = tpu.matmul %13, %11, %cst {dimension_numbers = #tpu.dot_dimension_numbers<[1], [0], [0], [1], [0, 0, 1, 1], [], []>} : vector<40x128xbf16>, vector<128x128xbf16>, vector<40x128xf32> -> vector<40x128xf32>
    %15 = arith.addf %12, %14 : vector<40x128xf32>
    %c0_9 = arith.constant 0 : index
    %c0_10 = arith.constant 0 : index
    %16 = vector.load %arg11[%c0_9, %c0_10] : memref<40x128xf32, #tpu.memory_space<vmem>>, vector<40x128xf32>
    tpu.vector_store %arg11[%c0_9, %c0_10], %15 {strides = array<i32>} : memref<40x128xf32, #tpu.memory_space<vmem>>, vector<40x128xf32>,
    %c2_i32 = arith.constant 2 : i32
    %17 = arith.cmpi eq, %arg1, %c2_i32 : i32
    %18 = arith.extui %17 : i1 to i32
    %c0_i32_11 = arith.constant 0 : i32
    %19 = arith.cmpi ne, %18, %c0_i32_11 : i32
    scf.if %19 {
      %c0_12 = arith.constant 0 : index
      %c0_13 = arith.constant 0 : index
      %20 = vector.load %arg11[%c0_12, %c0_13] : memref<40x128xf32, #tpu.memory_space<vmem>>, vector<40x128xf32>
      %21 = vector.extract_strided_slice %20 {offsets = [32, 0], sizes = [1, 128], strides = [1, 1]} : vector<40x128xf32> to vector<1x128xf32>
      %cst_14 = arith.constant 0.000000e+00 : f32
      %22 = vector.broadcast %cst_14 : f32 to vector<1x128xf32>
      %23 = arith.cmpf ogt, %21, %22 : vector<1x128xf32>
      %24 = math.rsqrt %21 : vector<1x128xf32>
      %cst_15 = arith.constant 0.000000e+00 : f32
      %25 = vector.broadcast %cst_15 : f32 to vector<1x128xf32>
      %26 = arith.select %23, %24, %25 : vector<1x128xi1>, vector<1x128xf32>
      %c0_16 = arith.constant 0 : index
      %c0_17 = arith.constant 0 : index
      %27 = vector.load %arg7[%c0_16, %c0_17] : memref<40x128xf32, #tpu.memory_space<vmem>>, vector<40x128xf32>
      %c0_18 = arith.constant 0 : index
      %c0_19 = arith.constant 0 : index
      %28 = vector.load %arg6[%c0_18, %c0_19] : memref<40x128xf32, #tpu.memory_space<vmem>>, vector<40x128xf32>
      %29 = vector.broadcast %26 : vector<1x128xf32> to vector<40x128xf32>
      %30 = arith.mulf %29, %20 : vector<40x128xf32>
      %31 = arith.addf %28, %30 : vector<40x128xf32>
      %32 = arith.mulf %27, %31 : vector<40x128xf32>
      %cst_20 = arith.constant dense<0.000000e+00> : vector<128xf32>
      %33 = vector.multi_reduction <add>, %32, %cst_20 [0] : vector<40x128xf32> to vector<128xf32>
      %34 = vector.shape_cast %33 : vector<128xf32> to vector<1x128xf32>
      %c0_21 = arith.constant 0 : index
      %c0_22 = arith.constant 0 : index
      %c0_23 = arith.constant 0 : index
      %35 = vector.load %arg8[%c0_21, %c0_22, %c0_23] : memref<1x1x128xf32, #tpu.memory_space<vmem>>, vector<1x1x128xf32>
      %36 = vector.shape_cast %35 : vector<1x1x128xf32> to vector<1x128xf32>
      %37 = arith.addf %34, %36 : vector<1x128xf32>
      %c0_24 = arith.constant 0 : index
      %c0_25 = arith.constant 0 : index
      %c0_26 = arith.constant 0 : index
      %38 = vector.load %arg9[%c0_24, %c0_25, %c0_26] : memref<1x1x128xf32, #tpu.memory_space<vmem>>, vector<1x1x128xf32>
      %39 = vector.shape_cast %38 : vector<1x1x128xf32> to vector<1x128xf32>
      %40 = arith.addf %37, %39 : vector<1x128xf32>
      %c0_27 = arith.constant 0 : index
      %c0_28 = arith.constant 0 : index
      %41 = memref.load %arg2[%c0_27, %c0_28] : memref<1x1xf32, #tpu.memory_space<smem>>
      %42 = vector.broadcast %41 : f32 to vector<1x128xf32>
      %43 = arith.addf %40, %42 : vector<1x128xf32>
      %c0_29 = arith.constant 0 : index
      %c0_30 = arith.constant 0 : index
      %c0_31 = arith.constant 0 : index
      %44 = vector.load %arg10[%c0_29, %c0_30, %c0_31] : memref<1x1x128xf32, #tpu.memory_space<vmem>>, vector<1x1x128xf32>
      %45 = vector.shape_cast %44 : vector<1x1x128xf32> to vector<1x128xf32>
      %46 = vector.shape_cast %43 : vector<1x128xf32> to vector<1x1x128xf32>
      tpu.vector_store %arg10[%c0_29, %c0_30, %c0_31], %46 {strides = array<i32>} : memref<1x1x128xf32, #tpu.memory_space<vmem>>, vector<1x1x128xf32>,
    } else {
    }
    return
  }
  func.func @transform_0(%arg0: i32, %arg1: i32) -> (i32, i32) {
    %c0_i32 = arith.constant 0 : i32
    %c0_i32_0 = arith.constant 0 : i32
    %c0_i32_1 = arith.constant 0 : i32
    return %c0_i32, %c0_i32_0 : i32, i32
  }
  func.func @transform_1(%arg0: i32, %arg1: i32) -> (i32, i32, i32) {
    %c0_i32 = arith.constant 0 : i32
    %c0_i32_0 = arith.constant 0 : i32
    %c0_i32_1 = arith.constant 0 : i32
    return %arg0, %c0_i32, %c0_i32_0 : i32, i32, i32
  }
  func.func @transform_2(%arg0: i32, %arg1: i32) -> (i32, i32) {
    %c0_i32 = arith.constant 0 : i32
    %c0_i32_0 = arith.constant 0 : i32
    return %arg1, %c0_i32 : i32, i32
  }
  func.func @transform_3(%arg0: i32, %arg1: i32) -> (i32, i32) {
    %c0_i32 = arith.constant 0 : i32
    %c0_i32_0 = arith.constant 0 : i32
    return %c0_i32, %arg1 : i32, i32
  }
  func.func @transform_4(%arg0: i32, %arg1: i32) -> (i32, i32) {
    %c0_i32 = arith.constant 0 : i32
    %c0_i32_0 = arith.constant 0 : i32
    return %c0_i32, %arg0 : i32, i32
  }
  func.func @transform_5(%arg0: i32, %arg1: i32) -> (i32, i32) {
    %c0_i32 = arith.constant 0 : i32
    %c0_i32_0 = arith.constant 0 : i32
    return %c0_i32, %arg0 : i32, i32
  }
  func.func @transform_6(%arg0: i32, %arg1: i32) -> (i32, i32, i32) {
    %c0_i32 = arith.constant 0 : i32
    %c0_i32_0 = arith.constant 0 : i32
    %c0_i32_1 = arith.constant 0 : i32
    return %arg0, %c0_i32, %c0_i32_0 : i32, i32, i32
  }
  func.func @transform_7(%arg0: i32, %arg1: i32) -> (i32, i32, i32) {
    %c0_i32 = arith.constant 0 : i32
    %c0_i32_0 = arith.constant 0 : i32
    %c0_i32_1 = arith.constant 0 : i32
    return %arg0, %c0_i32, %c0_i32_0 : i32, i32, i32
  }
  func.func @transform_8(%arg0: i32, %arg1: i32) -> (i32, i32, i32) {
    %c0_i32 = arith.constant 0 : i32
    %c0_i32_0 = arith.constant 0 : i32
    %c0_i32_1 = arith.constant 0 : i32
    return %arg0, %c0_i32, %c0_i32_0 : i32, i32, i32
  }
}

</mosaic_0001>

<llo_original>
// kernel: tpu_custom_call.1
$region0: #{tpu_custom_call.1}
  #allocation0 [shape = 'u32[]', space=smem, size = 0x4, offset = 0x4, fixed_abs, tag = 'smem constant byte address 0x4 - core index']
  #allocation1 [shape = 'u32[144,128]{1,0:T(1,128)}', space=vmem, size = 0x12000, scoped, tag = 'internal scratch']
  #allocation2 [shape = 'f32[40,128]{1,0:T(8,128)}', space=vmem, size = 0x5000, scoped, tag = 'scratch operand']
  #allocation3 [shape = 'f32[1,1]{1,0:T(1,128)S(6)}', space=smem, size = 0x200, scoped, tag = 'scoped memory for tpu_custom_call.1']
  %s0 = inlined_call_operand.<no memory space> [shape: f32[1,1], index: 0, kind: input, shape index: {}]
  %s1 = inlined_call_operand.vmem [shape: s32[2,1,128], index: 1, kind: input, shape index: {}]
  %s2 = inlined_call_operand.vmem [shape: s32[384,1], index: 2, kind: input, shape index: {}]
  %s3 = inlined_call_operand.vmem [shape: bf16[40,384], index: 3, kind: input, shape index: {}]
  %s4 = inlined_call_operand.vmem [shape: f32[40,256], index: 4, kind: input, shape index: {}]
  %s5 = inlined_call_operand.vmem [shape: f32[40,256], index: 5, kind: input, shape index: {}]
  %s6 = inlined_call_operand.vmem [shape: f32[2,1,128], index: 6, kind: input, shape index: {}]
  %s7 = inlined_call_operand.vmem [shape: f32[2,1,128], index: 7, kind: input, shape index: {}]
  %s8 = inlined_call_operand.hbm [shape: f32[2,1,128], index: 8, kind: output, shape index: {}]
  %s9 = sld [smem:[#allocation0]]
  $region190: #{tpu_custom_call.1} parent=0
    _
  %s11 = ssub.s32 1, %s9
  %s12 = scalar_select 0, %s11, %s9
  %13 = sst [smem:[#allocation3]] %s0
  $region1: #{tpu_custom_call.1} parent=0
    #allocation4 [shape = 'u8[20480]{0}', space=vmem, size = 0x5000, scoped, tag = 'input window, operand 3']
    #allocation5 [shape = 'u8[40960]{0}', space=vmem, size = 0xa000, scoped, tag = 'input window, operand 4']
    #allocation6 [shape = 'u8[40960]{0}', space=vmem, size = 0xa000, scoped, tag = 'input window, operand 5']
    #allocation7 [shape = 'u8[1024]{0}', space=vmem, size = 0x400, scoped, tag = 'output window, operand 0']
    #allocation8 [shape = 's32[2]{0}', space=sflag, size = 0x8, scoped, tag = 'scoped memory for tpu_custom_call.1']
    %14 = vsyncpa [#allocation8], 0
    %s15 = scalar_lea.sflag [#allocation8], 1
    %16 = vsyncpa %s15, 0
    loop: start=0, step=1, limit=8
    $region2: #{tpu_custom_call.1} parent=1 // loop_pre_header
      _
    $region3: #{tpu_custom_call.1} parent=1 // loop_header
      %s18 = sphi 0, %s22
      %p19 = scmp.ge.s32.totalorder %s18, 8
      %s25 = sphi 0, %s37
      %s26 = sphi 0, %s33
      %s27 = sphi 0, %s25
      %s28 = sphi 0, %s26
      %s29 = sphi 0, %s27
      %s30 = sphi 0, %s28
      %s38 = sphi 0, %s38
      %s40 = sphi 0, %s38
      %s41 = sphi 0, %s40
      %s55 = sphi 0, %s41
      %s61 = sphi 0, %s63
      %s64 = sphi 0, %s61
      %s65 = sphi 0, %s64
      %s81 = sphi 0, %s65
      %s87 = sphi 0, %s89
      %s90 = sphi 0, %s87
      %s91 = sphi 0, %s90
      %s107 = sphi 0, %s91
      %s113 = sphi 0, %s115
      %s116 = sphi 0, %s113
      %s117 = sphi 0, %s116
      %s133 = sphi 0, %s117
      %s139 = sphi 0, %s141
      %s142 = sphi 0, %s139
      %s143 = sphi 0, %s142
      %s159 = sphi 0, %s143
      %s165 = sphi 0, %s167
      %s168 = sphi 0, %s165
      %s169 = sphi 0, %s168
      %s185 = sphi 0, %s169
      %s191 = sphi 0, %s193
      %s194 = sphi 0, %s191
      %s195 = sphi 0, %s194
      %s211 = sphi 0, %s195
      %s217 = sphi 0, %s219
      %s220 = sphi 0, %s217
      %s221 = sphi 0, %s220
      %s237 = sphi 0, %s221
      %s243 = sphi 0, %s245
      %s246 = sphi 0, %s243
      %s247 = sphi 0, %s246
      %s263 = sphi 0, %s247
    $region4: #{tpu_custom_call.1} parent=1 // loop_header_branch
      %21 = sbr.rel (%p19) target = $region8
    $region5: #{tpu_custom_call.1} parent=1 // loop_body
      %s23 = ssub.s32 %s18, 1
      %s24 = ssub.s32 %s18, 2
      %s31 = sadd.s32 1, %s26
      %p32 = scmp.ge.s32.totalorder %s31, 3
      %s33 = scalar_select %p32, 0, %s31
      %s34 = sadd.s32 1, %s25
      %s35 = scalar_select %p32, %s34, %s25
      %p36 = scmp.ge.s32.totalorder %s35, 2
      %s37 = scalar_select %p36, 0, %s35
      %s39 = sadd.s32 %s38, 1
      %p42 = scmp.eq.s32.totalorder %s18, 5
      %p43 = scmp.ne.s32.totalorder %s38, %s40
      %p44 = scmp.eq.s32.totalorder %s18, 0
      %p45 = por %p43, %p44
      %p46 = scmp.ne.s32.totalorder %s38, %s40
      %p47 = scmp.eq.s32.totalorder %s23, 5
      %p48 = por %p46, %p47
      %p49 = scmp.ne.s32.totalorder %s40, %s41
      %p50 = scmp.eq.s32.totalorder %s23, 0
      %p51 = por %p49, %p50
      %p52 = scmp.ne.s32.totalorder %s40, %s41
      %p53 = scmp.eq.s32.totalorder %s24, 5
      %p54 = por %p52, %p53
      %p56 = scmp.ne.s32.totalorder %s41, %s55
      %p57 = scmp.eq.s32.totalorder %s24, 0
      %p58 = por %p56, %p57
      %s59 = ssub.s32 %s25, %s37
      %p60 = scmp.eq.s32.totalorder %s59, 0
      %s62 = sadd.s32 %s61, 1
      %s63 = scalar_select %p60, %s61, %s62
      %p66 = pneg %p60
      %p67 = scmp.eq.s32.totalorder %s18, 5
      %p68 = por %p66, %p67
      %p69 = scmp.ne.s32.totalorder %s61, %s64
      %p70 = scmp.eq.s32.totalorder %s18, 0
      %p71 = por %p69, %p70
      %p72 = scmp.ne.s32.totalorder %s61, %s64
      %p73 = scmp.eq.s32.totalorder %s23, 5
      %p74 = por %p72, %p73
      %p75 = scmp.ne.s32.totalorder %s64, %s65
      %p76 = scmp.eq.s32.totalorder %s23, 0
      %p77 = por %p75, %p76
      %p78 = scmp.ne.s32.totalorder %s64, %s65
      %p79 = scmp.eq.s32.totalorder %s24, 5
      %p80 = por %p78, %p79
      %p82 = scmp.ne.s32.totalorder %s65, %s81
      %p83 = scmp.eq.s32.totalorder %s24, 0
      %p84 = por %p82, %p83
      %s85 = ssub.s32 %s26, %s33
      %p86 = scmp.eq.s32.totalorder %s85, 0
      %s88 = sadd.s32 %s87, 1
      %s89 = scalar_select %p86, %s87, %s88
      %p92 = pneg %p86
      %p93 = scmp.eq.s32.totalorder %s18, 5
      %p94 = por %p92, %p93
      %p95 = scmp.ne.s32.totalorder %s87, %s90
      %p96 = scmp.eq.s32.totalorder %s18, 0
      %p97 = por %p95, %p96
      %p98 = scmp.ne.s32.totalorder %s87, %s90
      %p99 = scmp.eq.s32.totalorder %s23, 5
      %p100 = por %p98, %p99
      %p101 = scmp.ne.s32.totalorder %s90, %s91
      %p102 = scmp.eq.s32.totalorder %s23, 0
      %p103 = por %p101, %p102
      %p104 = scmp.ne.s32.totalorder %s90, %s91
      %p105 = scmp.eq.s32.totalorder %s24, 5
      %p106 = por %p104, %p105
      %p108 = scmp.ne.s32.totalorder %s91, %s107
      %p109 = scmp.eq.s32.totalorder %s24, 0
      %p110 = por %p108, %p109
      %s111 = ssub.s32 %s26, %s33
      %p112 = scmp.eq.s32.totalorder %s111, 0
      %s114 = sadd.s32 %s113, 1
      %s115 = scalar_select %p112, %s113, %s114
      %p118 = pneg %p112
      %p119 = scmp.eq.s32.totalorder %s18, 5
      %p120 = por %p118, %p119
      %p121 = scmp.ne.s32.totalorder %s113, %s116
      %p122 = scmp.eq.s32.totalorder %s18, 0
      %p123 = por %p121, %p122
      %p124 = scmp.ne.s32.totalorder %s113, %s116
      %p125 = scmp.eq.s32.totalorder %s23, 5
      %p126 = por %p124, %p125
      %p127 = scmp.ne.s32.totalorder %s116, %s117
      %p128 = scmp.eq.s32.totalorder %s23, 0
      %p129 = por %p127, %p128
      %p130 = scmp.ne.s32.totalorder %s116, %s117
      %p131 = scmp.eq.s32.totalorder %s24, 5
      %p132 = por %p130, %p131
      %p134 = scmp.ne.s32.totalorder %s117, %s133
      %p135 = scmp.eq.s32.totalorder %s24, 0
      %p136 = por %p134, %p135
      %s137 = ssub.s32 %s25, %s37
      %p138 = scmp.eq.s32.totalorder %s137, 0
      %s140 = sadd.s32 %s139, 1
      %s141 = scalar_select %p138, %s139, %s140
      %p144 = pneg %p138
      %p145 = scmp.eq.s32.totalorder %s18, 5
      %p146 = por %p144, %p145
      %p147 = scmp.ne.s32.totalorder %s139, %s142
      %p148 = scmp.eq.s32.totalorder %s18, 0
      %p149 = por %p147, %p148
      %p150 = scmp.ne.s32.totalorder %s139, %s142
      %p151 = scmp.eq.s32.totalorder %s23, 5
      %p152 = por %p150, %p151
      %p153 = scmp.ne.s32.totalorder %s142, %s143
      %p154 = scmp.eq.s32.totalorder %s23, 0
      %p155 = por %p153, %p154
      %p156 = scmp.ne.s32.totalorder %s142, %s143
      %p157 = scmp.eq.s32.totalorder %s24, 5
      %p158 = por %p156, %p157
      %p160 = scmp.ne.s32.totalorder %s143, %s159
      %p161 = scmp.eq.s32.totalorder %s24, 0
      %p162 = por %p160, %p161
      %s163 = ssub.s32 %s25, %s37
      %p164 = scmp.eq.s32.totalorder %s163, 0
      %s166 = sadd.s32 %s165, 1
      %s167 = scalar_select %p164, %s165, %s166
      %p170 = pneg %p164
      %p171 = scmp.eq.s32.totalorder %s18, 5
      %p172 = por %p170, %p171
      %p173 = scmp.ne.s32.totalorder %s165, %s168
      %p174 = scmp.eq.s32.totalorder %s18, 0
      %p175 = por %p173, %p174
      %p176 = scmp.ne.s32.totalorder %s165, %s168
      %p177 = scmp.eq.s32.totalorder %s23, 5
      %p178 = por %p176, %p177
      %p179 = scmp.ne.s32.totalorder %s168, %s169
      %p180 = scmp.eq.s32.totalorder %s23, 0
      %p181 = por %p179, %p180
      %p182 = scmp.ne.s32.totalorder %s168, %s169
      %p183 = scmp.eq.s32.totalorder %s24, 5
      %p184 = por %p182, %p183
      %p186 = scmp.ne.s32.totalorder %s169, %s185
      %p187 = scmp.eq.s32.totalorder %s24, 0
      %p188 = por %p186, %p187
      %s189 = ssub.s32 %s25, %s37
      %p190 = scmp.eq.s32.totalorder %s189, 0
      %s192 = sadd.s32 %s191, 1
      %s193 = scalar_select %p190, %s191, %s192
      %p196 = pneg %p190
      %p197 = scmp.eq.s32.totalorder %s18, 5
      %p198 = por %p196, %p197
      %p199 = scmp.ne.s32.totalorder %s191, %s194
      %p200 = scmp.eq.s32.totalorder %s18, 0
      %p201 = por %p199, %p200
      %p202 = scmp.ne.s32.totalorder %s191, %s194
      %p203 = scmp.eq.s32.totalorder %s23, 5
      %p204 = por %p202, %p203
      %p205 = scmp.ne.s32.totalorder %s194, %s195
      %p206 = scmp.eq.s32.totalorder %s23, 0
      %p207 = por %p205, %p206
      %p208 = scmp.ne.s32.totalorder %s194, %s195
      %p209 = scmp.eq.s32.totalorder %s24, 5
      %p210 = por %p208, %p209
      %p212 = scmp.ne.s32.totalorder %s195, %s211
      %p213 = scmp.eq.s32.totalorder %s24, 0
      %p214 = por %p212, %p213
      %s215 = ssub.s32 %s25, %s37
      %p216 = scmp.eq.s32.totalorder %s215, 0
      %s218 = sadd.s32 %s217, 1
      %s219 = scalar_select %p216, %s217, %s218
      %p222 = pneg %p216
      %p223 = scmp.eq.s32.totalorder %s18, 5
      %p224 = por %p222, %p223
      %p225 = scmp.ne.s32.totalorder %s217, %s220
      %p226 = scmp.eq.s32.totalorder %s18, 0
      %p227 = por %p225, %p226
      %p228 = scmp.ne.s32.totalorder %s217, %s220
      %p229 = scmp.eq.s32.totalorder %s23, 5
      %p230 = por %p228, %p229
      %p231 = scmp.ne.s32.totalorder %s220, %s221
      %p232 = scmp.eq.s32.totalorder %s23, 0
      %p233 = por %p231, %p232
      %p234 = scmp.ne.s32.totalorder %s220, %s221
      %p235 = scmp.eq.s32.totalorder %s24, 5
      %p236 = por %p234, %p235
      %p238 = scmp.ne.s32.totalorder %s221, %s237
      %p239 = scmp.eq.s32.totalorder %s24, 0
      %p240 = por %p238, %p239
      %s241 = ssub.s32 %s25, %s37
      %p242 = scmp.eq.s32.totalorder %s241, 0
      %s244 = sadd.s32 %s243, 1
      %s245 = scalar_select %p242, %s243, %s244
      %p248 = pneg %p242
      %p249 = scmp.eq.s32.totalorder %s18, 5
      %p250 = por %p248, %p249
      %p251 = scmp.ne.s32.totalorder %s243, %s246
      %p252 = scmp.eq.s32.totalorder %s18, 0
      %p253 = por %p251, %p252
      %p254 = scmp.ne.s32.totalorder %s243, %s246
      %p255 = scmp.eq.s32.totalorder %s23, 5
      %p256 = por %p254, %p255
      %p257 = scmp.ne.s32.totalorder %s246, %s247
      %p258 = scmp.eq.s32.totalorder %s23, 0
      %p259 = por %p257, %p258
      %p260 = scmp.ne.s32.totalorder %s246, %s247
      %p261 = scmp.eq.s32.totalorder %s24, 5
      %p262 = por %p260, %p261
      %p264 = scmp.ne.s32.totalorder %s247, %s263
      %p265 = scmp.eq.s32.totalorder %s24, 0
      %p266 = por %p264, %p265
      %p267 = scmp.le.s32.totalorder 1, %s18
      %p268 = scmp.lt.s32.totalorder %s18, 7
      %p269 = pnand %p267, %p268
      %p270 = pneg %p269
      // Predicated region
      $region9: #{tpu_custom_call.1} parent=5 // pred_check
        _
      $region10: #{tpu_custom_call.1} parent=5 // pred_check_branch
        %272 = sbr.rel (%p269) target = $region12
      $region11: #{tpu_custom_call.1} parent=5 // pred_region
        %s273 = ssub.s32 %s18, 1
        // Predicated region
        $region13: #{tpu_custom_call.1} parent=11 // pred_check
          %p274 = pneg %p51
        $region14: #{tpu_custom_call.1} parent=11 // pred_check_branch
          %276 = sbr.rel (%p274) target = $region16
        $region15: #{tpu_custom_call.1} parent=11 // pred_region
          _
        $region16: #{tpu_custom_call.1} parent=11 // pred_fallthru
          _
      $region12: #{tpu_custom_call.1} parent=5 // pred_fallthru
        _
      %p277 = scmp.lt.s32.totalorder %s18, 6
      // Predicated region
      $region17: #{tpu_custom_call.1} parent=5 // pred_check
        %p278 = pneg %p277
      $region18: #{tpu_custom_call.1} parent=5 // pred_check_branch
        %280 = sbr.rel (%p278) target = $region20
      $region19: #{tpu_custom_call.1} parent=5 // pred_region
        // Predicated region
        $region21: #{tpu_custom_call.1} parent=19 // pred_check
          %p281 = pneg %p71
        $region22: #{tpu_custom_call.1} parent=19 // pred_check_branch
          %283 = sbr.rel (%p281) target = $region24
        $region23: #{tpu_custom_call.1} parent=19 // pred_region
          %p284 = scmp.lt.s32.totalorder %s25, 1
          %s285 = scalar_select %p284, %s25, 1
          %s286 = scalar_lea.vmem %s1, %s285
        $region24: #{tpu_custom_call.1} parent=19 // pred_fallthru
          _
        // Predicated region
        $region25: #{tpu_custom_call.1} parent=19 // pred_check
          %p287 = pneg %p97
        $region26: #{tpu_custom_call.1} parent=19 // pred_check_branch
          %289 = sbr.rel (%p287) target = $region28
        $region27: #{tpu_custom_call.1} parent=19 // pred_region
          %s290 = smul.u32 16, %s26
          %p291 = scmp.lt.s32.totalorder %s290, 47
          %s292 = scalar_select %p291, %s290, 47
          %s293 = smul.addr %s292, 8
          %s294 = scalar_lea.vmem %s2, %s293
          %s295 = smul.u32 16, %s26
        $region28: #{tpu_custom_call.1} parent=19 // pred_fallthru
          _
        // Predicated region
        $region29: #{tpu_custom_call.1} parent=19 // pred_check
          %p296 = pneg %p123
        $region30: #{tpu_custom_call.1} parent=19 // pred_check_branch
          %298 = sbr.rel (%p296) target = $region32
        $region31: #{tpu_custom_call.1} parent=19 // pred_region
          %s299 = sand.u32 %s113, 1
          %s300 = sand.u32 %s113, 1
          %s301 = smul.addr %s300, 20
          %s302 = scalar_lea.vmem [#allocation4], %s301
          %s303 = smul.addr %s26, 4
          %s304 = scalar_lea.vmem %s3, %s303
          // Predicated region
          $region33: #{tpu_custom_call.1} parent=31 // pred_check
            _
          $region34: #{tpu_custom_call.1} parent=31 // pred_check_branch
            %306 = sbr.rel (0) target = $region36
          $region35: #{tpu_custom_call.1} parent=31 // pred_region
            // Predicated region
            $region37: #{tpu_custom_call.1} parent=35 // pred_check
              _
            $region38: #{tpu_custom_call.1} parent=35 // pred_check_branch
              %308 = sbr.rel target = $region40
            $region39: #{tpu_custom_call.1} parent=35 // pred_region
              // Predicated region
              $region52: #{tpu_custom_call.1} parent=39 // pred_check
                _
              $region53: #{tpu_custom_call.1} parent=39 // pred_check_branch
                %331 = sbr.rel (0) target = $region55
              $region54: #{tpu_custom_call.1} parent=39 // pred_region
                loop: start=0, step=1, limit=1
                $region56: #{tpu_custom_call.1} parent=54 // loop_pre_header
                  _
                $region57: #{tpu_custom_call.1} parent=54 // loop_header
                  %s333 = sphi 0, %s337
                  %p334 = scmp.ge.s32.totalorder %s333, 1
                  %s338 = sphi %s304, %s304
                  %s339 = sphi %s302, %s302
                $region58: #{tpu_custom_call.1} parent=54 // loop_header_branch
                  %336 = sbr.rel (%p334) target = $region62
                $region59: #{tpu_custom_call.1} parent=54 // loop_body
                  _
                $region60: #{tpu_custom_call.1} parent=54 // loop_footer
                  %s337 = sadd.s32 1, %s333
                $region61: #{tpu_custom_call.1} parent=54 // loop_footer_branch
                  %332 = sbr.rel target = $region57
                $region62: #{tpu_custom_call.1} parent=54 // loop_exit
                  _
                loop: start=0, step=1, limit=1
                $region63: #{tpu_custom_call.1} parent=54 // loop_pre_header
                  _
                $region64: #{tpu_custom_call.1} parent=54 // loop_header
                  %s342 = sphi 0, %s346
                  %p343 = scmp.ge.s32.totalorder %s342, 1
                  %s347 = sphi %s304, %s304
                  %s348 = sphi %s302, %s302
                $region65: #{tpu_custom_call.1} parent=54 // loop_header_branch
                  %345 = sbr.rel (%p343) target = $region69
                $region66: #{tpu_custom_call.1} parent=54 // loop_body
                  %v349 = vld [vmem:[%s347] sm:$0xf]
                  %350 = vst [vmem:[%s348] sm:$0xf] %v349
                  %v351 = vld [vmem:[%s347 + $0xc] sm:$0xf]
                  %352 = vst [vmem:[%s348 + $0x4] sm:$0xf] %v351
                  %v353 = vld [vmem:[%s347 + $0x18] sm:$0xf]
                  %354 = vst [vmem:[%s348 + $0x8] sm:$0xf] %v353
                  %v355 = vld [vmem:[%s347 + $0x24] sm:$0xf]
                  %356 = vst [vmem:[%s348 + $0xc] sm:$0xf] %v355
                  %v357 = vld [vmem:[%s347 + $0x30] sm:$0xf]
                  %358 = vst [vmem:[%s348 + $0x10] sm:$0xf] %v357
                $region67: #{tpu_custom_call.1} parent=54 // loop_footer
                  %s346 = sadd.s32 1, %s342
                $region68: #{tpu_custom_call.1} parent=54 // loop_footer_branch
                  %341 = sbr.rel target = $region64
                $region69: #{tpu_custom_call.1} parent=54 // loop_exit
                  _
              $region55: #{tpu_custom_call.1} parent=39 // pred_fallthru
                _
            $region40: #{tpu_custom_call.1} parent=35 // pred_fallthru
              _
            // Predicated region
            $region41: #{tpu_custom_call.1} parent=35 // pred_check
              _
            $region42: #{tpu_custom_call.1} parent=35 // pred_check_branch
              %310 = sbr.rel (0) target = $region44
            $region43: #{tpu_custom_call.1} parent=35 // pred_region
              loop: start=0, step=1, limit=1
              $region45: #{tpu_custom_call.1} parent=43 // loop_pre_header
                _
              $region46: #{tpu_custom_call.1} parent=43 // loop_header
                %s313 = sphi 0, %s317
                %p314 = scmp.ge.s32.totalorder %s313, 1
                %s318 = sphi %s304, %s304
                %s319 = sphi %s302, %s302
              $region47: #{tpu_custom_call.1} parent=43 // loop_header_branch
                %316 = sbr.rel (%p314) target = $region51
              $region48: #{tpu_custom_call.1} parent=43 // loop_body
                %v320 = vld [vmem:[%s318] sm:$0xf]
                %321 = vst [vmem:[%s319] sm:$0xf] %v320
                %v322 = vld [vmem:[%s318 + $0xc] sm:$0xf]
                %323 = vst [vmem:[%s319 + $0x4] sm:$0xf] %v322
                %v324 = vld [vmem:[%s318 + $0x18] sm:$0xf]
                %325 = vst [vmem:[%s319 + $0x8] sm:$0xf] %v324
                %v326 = vld [vmem:[%s318 + $0x24] sm:$0xf]
                %327 = vst [vmem:[%s319 + $0xc] sm:$0xf] %v326
                %v328 = vld [vmem:[%s318 + $0x30] sm:$0xf]
                %329 = vst [vmem:[%s319 + $0x10] sm:$0xf] %v328
              $region49: #{tpu_custom_call.1} parent=43 // loop_footer
                %s317 = sadd.s32 1, %s313
              $region50: #{tpu_custom_call.1} parent=43 // loop_footer_branch
                %312 = sbr.rel target = $region46
              $region51: #{tpu_custom_call.1} parent=43 // loop_exit
                _
            $region44: #{tpu_custom_call.1} parent=35 // pred_fallthru
              _
          $region36: #{tpu_custom_call.1} parent=31 // pred_fallthru
            _
          %359 = vnop
        $region32: #{tpu_custom_call.1} parent=19 // pred_fallthru
          _
        // Predicated region
        $region70: #{tpu_custom_call.1} parent=19 // pred_check
          %p360 = pneg %p149
        $region71: #{tpu_custom_call.1} parent=19 // pred_check_branch
          %362 = sbr.rel (%p360) target = $region73
        $region72: #{tpu_custom_call.1} parent=19 // pred_region
          %s363 = sand.u32 %s139, 1
          %s364 = sand.u32 %s139, 1
          %s365 = smul.addr %s364, 40
          %s366 = scalar_lea.vmem [#allocation5], %s365
          %s367 = smul.addr %s25, 8
          %s368 = scalar_lea.vmem %s4, %s367
          // Predicated region
          $region74: #{tpu_custom_call.1} parent=72 // pred_check
            _
          $region75: #{tpu_custom_call.1} parent=72 // pred_check_branch
            %370 = sbr.rel (0) target = $region77
          $region76: #{tpu_custom_call.1} parent=72 // pred_region
            // Predicated region
            $region78: #{tpu_custom_call.1} parent=76 // pred_check
              _
            $region79: #{tpu_custom_call.1} parent=76 // pred_check_branch
              %372 = sbr.rel (0) target = $region81
            $region80: #{tpu_custom_call.1} parent=76 // pred_region
              // Predicated region
              $region93: #{tpu_custom_call.1} parent=80 // pred_check
                _
              $region94: #{tpu_custom_call.1} parent=80 // pred_check_branch
                %395 = sbr.rel (0) target = $region96
              $region95: #{tpu_custom_call.1} parent=80 // pred_region
                loop: start=0, step=1, limit=1
                $region97: #{tpu_custom_call.1} parent=95 // loop_pre_header
                  _
                $region98: #{tpu_custom_call.1} parent=95 // loop_header
                  %s397 = sphi 0, %s401
                  %p398 = scmp.ge.s32.totalorder %s397, 1
                  %s402 = sphi %s368, %s368
                  %s403 = sphi %s366, %s366
                $region99: #{tpu_custom_call.1} parent=95 // loop_header_branch
                  %400 = sbr.rel (%p398) target = $region103
                $region100: #{tpu_custom_call.1} parent=95 // loop_body
                  %v404 = vld [vmem:[%s402] sm:$0xff]
                  %405 = vst [vmem:[%s403] sm:$0xff] %v404
                  %v406 = vld [vmem:[%s402 + $0x10] sm:$0xff]
                  %407 = vst [vmem:[%s403 + $0x8] sm:$0xff] %v406
                  %v408 = vld [vmem:[%s402 + $0x20] sm:$0xff]
                  %409 = vst [vmem:[%s403 + $0x10] sm:$0xff] %v408
                  %v410 = vld [vmem:[%s402 + $0x30] sm:$0xff]
                  %411 = vst [vmem:[%s403 + $0x18] sm:$0xff] %v410
                  %v412 = vld [vmem:[%s402 + $0x40] sm:$0xff]
                  %413 = vst [vmem:[%s403 + $0x20] sm:$0xff] %v412
                $region101: #{tpu_custom_call.1} parent=95 // loop_footer
                  %s401 = sadd.s32 1, %s397
                $region102: #{tpu_custom_call.1} parent=95 // loop_footer_branch
                  %396 = sbr.rel target = $region98
                $region103: #{tpu_custom_call.1} parent=95 // loop_exit
                  _
              $region96: #{tpu_custom_call.1} parent=80 // pred_fallthru
                _
              // Predicated region
              $region104: #{tpu_custom_call.1} parent=80 // pred_check
                _
              $region105: #{tpu_custom_call.1} parent=80 // pred_check_branch
                %415 = sbr.rel target = $region107
              $region106: #{tpu_custom_call.1} parent=80 // pred_region
                _
              $region107: #{tpu_custom_call.1} parent=80 // pred_fallthru
                _
            $region81: #{tpu_custom_call.1} parent=76 // pred_fallthru
              _
            // Predicated region
            $region82: #{tpu_custom_call.1} parent=76 // pred_check
              _
            $region83: #{tpu_custom_call.1} parent=76 // pred_check_branch
              %374 = sbr.rel target = $region85
            $region84: #{tpu_custom_call.1} parent=76 // pred_region
              loop: start=0, step=1, limit=1
              $region86: #{tpu_custom_call.1} parent=84 // loop_pre_header
                _
              $region87: #{tpu_custom_call.1} parent=84 // loop_header
                %s377 = sphi 0, %s381
                %p378 = scmp.ge.s32.totalorder %s377, 1
                %s382 = sphi %s368, %s368
                %s383 = sphi %s366, %s366
              $region88: #{tpu_custom_call.1} parent=84 // loop_header_branch
                %380 = sbr.rel (%p378) target = $region92
              $region89: #{tpu_custom_call.1} parent=84 // loop_body
                %v384 = vld [vmem:[%s382] sm:$0xff]
                %385 = vst [vmem:[%s383] sm:$0xff] %v384
                %v386 = vld [vmem:[%s382 + $0x10] sm:$0xff]
                %387 = vst [vmem:[%s383 + $0x8] sm:$0xff] %v386
                %v388 = vld [vmem:[%s382 + $0x20] sm:$0xff]
                %389 = vst [vmem:[%s383 + $0x10] sm:$0xff] %v388
                %v390 = vld [vmem:[%s382 + $0x30] sm:$0xff]
                %391 = vst [vmem:[%s383 + $0x18] sm:$0xff] %v390
                %v392 = vld [vmem:[%s382 + $0x40] sm:$0xff]
                %393 = vst [vmem:[%s383 + $0x20] sm:$0xff] %v392
              $region90: #{tpu_custom_call.1} parent=84 // loop_footer
                %s381 = sadd.s32 1, %s377
              $region91: #{tpu_custom_call.1} parent=84 // loop_footer_branch
                %376 = sbr.rel target = $region87
              $region92: #{tpu_custom_call.1} parent=84 // loop_exit
                _
            $region85: #{tpu_custom_call.1} parent=76 // pred_fallthru
              _
          $region77: #{tpu_custom_call.1} parent=72 // pred_fallthru
            _
          %416 = vnop
        $region73: #{tpu_custom_call.1} parent=19 // pred_fallthru
          _
        // Predicated region
        $region108: #{tpu_custom_call.1} parent=19 // pred_check
          %p417 = pneg %p175
        $region109: #{tpu_custom_call.1} parent=19 // pred_check_branch
          %419 = sbr.rel (%p417) target = $region111
        $region110: #{tpu_custom_call.1} parent=19 // pred_region
          %s420 = sand.u32 %s165, 1
          %s421 = sand.u32 %s165, 1
          %s422 = smul.addr %s421, 40
          %s423 = scalar_lea.vmem [#allocation6], %s422
          %s424 = smul.addr %s25, 8
          %s425 = scalar_lea.vmem %s5, %s424
          // Predicated region
          $region112: #{tpu_custom_call.1} parent=110 // pred_check
            _
          $region113: #{tpu_custom_call.1} parent=110 // pred_check_branch
            %427 = sbr.rel (0) target = $region115
          $region114: #{tpu_custom_call.1} parent=110 // pred_region
            // Predicated region
            $region116: #{tpu_custom_call.1} parent=114 // pred_check
              _
            $region117: #{tpu_custom_call.1} parent=114 // pred_check_branch
              %429 = sbr.rel (0) target = $region119
            $region118: #{tpu_custom_call.1} parent=114 // pred_region
              // Predicated region
              $region131: #{tpu_custom_call.1} parent=118 // pred_check
                _
              $region132: #{tpu_custom_call.1} parent=118 // pred_check_branch
                %452 = sbr.rel (0) target = $region134
              $region133: #{tpu_custom_call.1} parent=118 // pred_region
                loop: start=0, step=1, limit=1
                $region135: #{tpu_custom_call.1} parent=133 // loop_pre_header
                  _
                $region136: #{tpu_custom_call.1} parent=133 // loop_header
                  %s454 = sphi 0, %s458
                  %p455 = scmp.ge.s32.totalorder %s454, 1
                  %s459 = sphi %s425, %s425
                  %s460 = sphi %s423, %s423
                $region137: #{tpu_custom_call.1} parent=133 // loop_header_branch
                  %457 = sbr.rel (%p455) target = $region141
                $region138: #{tpu_custom_call.1} parent=133 // loop_body
                  %v461 = vld [vmem:[%s459] sm:$0xff]
                  %462 = vst [vmem:[%s460] sm:$0xff] %v461
                  %v463 = vld [vmem:[%s459 + $0x10] sm:$0xff]
                  %464 = vst [vmem:[%s460 + $0x8] sm:$0xff] %v463
                  %v465 = vld [vmem:[%s459 + $0x20] sm:$0xff]
                  %466 = vst [vmem:[%s460 + $0x10] sm:$0xff] %v465
                  %v467 = vld [vmem:[%s459 + $0x30] sm:$0xff]
                  %468 = vst [vmem:[%s460 + $0x18] sm:$0xff] %v467
                  %v469 = vld [vmem:[%s459 + $0x40] sm:$0xff]
                  %470 = vst [vmem:[%s460 + $0x20] sm:$0xff] %v469
                $region139: #{tpu_custom_call.1} parent=133 // loop_footer
                  %s458 = sadd.s32 1, %s454
                $region140: #{tpu_custom_call.1} parent=133 // loop_footer_branch
                  %453 = sbr.rel target = $region136
                $region141: #{tpu_custom_call.1} parent=133 // loop_exit
                  _
              $region134: #{tpu_custom_call.1} parent=118 // pred_fallthru
                _
              // Predicated region
              $region142: #{tpu_custom_call.1} parent=118 // pred_check
                _
              $region143: #{tpu_custom_call.1} parent=118 // pred_check_branch
                %472 = sbr.rel target = $region145
              $region144: #{tpu_custom_call.1} parent=118 // pred_region
                _
              $region145: #{tpu_custom_call.1} parent=118 // pred_fallthru
                _
            $region119: #{tpu_custom_call.1} parent=114 // pred_fallthru
              _
            // Predicated region
            $region120: #{tpu_custom_call.1} parent=114 // pred_check
              _
            $region121: #{tpu_custom_call.1} parent=114 // pred_check_branch
              %431 = sbr.rel target = $region123
            $region122: #{tpu_custom_call.1} parent=114 // pred_region
              loop: start=0, step=1, limit=1
              $region124: #{tpu_custom_call.1} parent=122 // loop_pre_header
                _
              $region125: #{tpu_custom_call.1} parent=122 // loop_header
                %s434 = sphi 0, %s438
                %p435 = scmp.ge.s32.totalorder %s434, 1
                %s439 = sphi %s425, %s425
                %s440 = sphi %s423, %s423
              $region126: #{tpu_custom_call.1} parent=122 // loop_header_branch
                %437 = sbr.rel (%p435) target = $region130
              $region127: #{tpu_custom_call.1} parent=122 // loop_body
                %v441 = vld [vmem:[%s439] sm:$0xff]
                %442 = vst [vmem:[%s440] sm:$0xff] %v441
                %v443 = vld [vmem:[%s439 + $0x10] sm:$0xff]
                %444 = vst [vmem:[%s440 + $0x8] sm:$0xff] %v443
                %v445 = vld [vmem:[%s439 + $0x20] sm:$0xff]
                %446 = vst [vmem:[%s440 + $0x10] sm:$0xff] %v445
                %v447 = vld [vmem:[%s439 + $0x30] sm:$0xff]
                %448 = vst [vmem:[%s440 + $0x18] sm:$0xff] %v447
                %v449 = vld [vmem:[%s439 + $0x40] sm:$0xff]
                %450 = vst [vmem:[%s440 + $0x20] sm:$0xff] %v449
              $region128: #{tpu_custom_call.1} parent=122 // loop_footer
                %s438 = sadd.s32 1, %s434
              $region129: #{tpu_custom_call.1} parent=122 // loop_footer_branch
                %433 = sbr.rel target = $region125
              $region130: #{tpu_custom_call.1} parent=122 // loop_exit
                _
            $region123: #{tpu_custom_call.1} parent=114 // pred_fallthru
              _
          $region115: #{tpu_custom_call.1} parent=110 // pred_fallthru
            _
          %473 = vnop
        $region111: #{tpu_custom_call.1} parent=19 // pred_fallthru
          _
        // Predicated region
        $region146: #{tpu_custom_call.1} parent=19 // pred_check
          %p474 = pneg %p201
        $region147: #{tpu_custom_call.1} parent=19 // pred_check_branch
          %476 = sbr.rel (%p474) target = $region149
        $region148: #{tpu_custom_call.1} parent=19 // pred_region
          %p477 = scmp.lt.s32.totalorder %s25, 1
          %s478 = scalar_select %p477, %s25, 1
          %s479 = scalar_lea.vmem %s6, %s478
        $region149: #{tpu_custom_call.1} parent=19 // pred_fallthru
          _
        // Predicated region
        $region150: #{tpu_custom_call.1} parent=19 // pred_check
          %p480 = pneg %p227
        $region151: #{tpu_custom_call.1} parent=19 // pred_check_branch
          %482 = sbr.rel (%p480) target = $region153
        $region152: #{tpu_custom_call.1} parent=19 // pred_region
          %p483 = scmp.lt.s32.totalorder %s25, 1
          %s484 = scalar_select %p483, %s25, 1
          %s485 = scalar_lea.vmem %s7, %s484
        $region153: #{tpu_custom_call.1} parent=19 // pred_fallthru
          _
      $region20: #{tpu_custom_call.1} parent=5 // pred_fallthru
        _
      %p486 = scmp.le.s32.totalorder 1, %s18
      %p487 = scmp.lt.s32.totalorder %s18, 7
      %p488 = pnand %p486, %p487
      %p489 = pneg %p488
      // Predicated region
      $region154: #{tpu_custom_call.1} parent=5 // pred_check
        _
      $region155: #{tpu_custom_call.1} parent=5 // pred_check_branch
        %491 = sbr.rel (%p488) target = $region157
      $region156: #{tpu_custom_call.1} parent=5 // pred_region
        %s492 = ssub.s32 %s18, 1
        %s493 = sand.u32 %s116, 1
        %s494 = sand.u32 %s116, 1
        %s495 = smul.addr %s494, 20
        %s496 = scalar_lea.vmem [#allocation4], %s495
        // Predicated region
        $region158: #{tpu_custom_call.1} parent=156 // pred_check
          %p497 = pneg %p129
        $region159: #{tpu_custom_call.1} parent=156 // pred_check_branch
          %499 = sbr.rel (%p497) target = $region161
        $region160: #{tpu_custom_call.1} parent=156 // pred_region
          _
        $region161: #{tpu_custom_call.1} parent=156 // pred_fallthru
          _
        %s500 = sand.u32 %s142, 1
        %s501 = sand.u32 %s142, 1
        %s502 = smul.addr %s501, 40
        %s503 = scalar_lea.vmem [#allocation5], %s502
        // Predicated region
        $region162: #{tpu_custom_call.1} parent=156 // pred_check
          %p504 = pneg %p155
        $region163: #{tpu_custom_call.1} parent=156 // pred_check_branch
          %506 = sbr.rel (%p504) target = $region165
        $region164: #{tpu_custom_call.1} parent=156 // pred_region
          _
        $region165: #{tpu_custom_call.1} parent=156 // pred_fallthru
          _
        %s507 = sand.u32 %s168, 1
        %s508 = sand.u32 %s168, 1
        %s509 = smul.addr %s508, 40
        %s510 = scalar_lea.vmem [#allocation6], %s509
        // Predicated region
        $region166: #{tpu_custom_call.1} parent=156 // pred_check
          %p511 = pneg %p181
        $region167: #{tpu_custom_call.1} parent=156 // pred_check_branch
          %513 = sbr.rel (%p511) target = $region169
        $region168: #{tpu_custom_call.1} parent=156 // pred_region
          _
        $region169: #{tpu_custom_call.1} parent=156 // pred_fallthru
          _
        %p514 = pneg %p51
        %p515 = pneg %p48
        %p516 = scmp.lt.s32.totalorder %s27, 1
        %s517 = scalar_select %p516, %s27, 1
        %s518 = scalar_lea.vmem %s1, %s517
        %p519 = pneg %p77
        %p520 = pneg %p74
        %s521 = smul.u32 16, %s28
        %p522 = scmp.lt.s32.totalorder %s521, 47
        %s523 = scalar_select %p522, %s521, 47
        %s524 = smul.addr %s523, 8
        %s525 = scalar_lea.vmem %s2, %s524
        %p526 = pneg %p103
        %p527 = pneg %p100
        %s528 = sand.u32 %s116, 1
        %s529 = sand.u32 %s116, 1
        %s530 = smul.addr %s529, 20
        %s531 = scalar_lea.vmem [#allocation4], %s530
        %p532 = pneg %p129
        %p533 = pneg %p126
        %s534 = sand.u32 %s142, 1
        %s535 = sand.u32 %s142, 1
        %s536 = smul.addr %s535, 40
        %s537 = scalar_lea.vmem [#allocation5], %s536
        %p538 = pneg %p155
        %p539 = pneg %p152
        %s540 = sand.u32 %s168, 1
        %s541 = sand.u32 %s168, 1
        %s542 = smul.addr %s541, 40
        %s543 = scalar_lea.vmem [#allocation6], %s542
        %p544 = pneg %p181
        %p545 = pneg %p178
        %p546 = scmp.lt.s32.totalorder %s27, 1
        %s547 = scalar_select %p546, %s27, 1
        %s548 = scalar_lea.vmem %s6, %s547
        %p549 = pneg %p207
        %p550 = pneg %p204
        %p551 = scmp.lt.s32.totalorder %s27, 1
        %s552 = scalar_select %p551, %s27, 1
        %s553 = scalar_lea.vmem %s7, %s552
        %p554 = pneg %p233
        %p555 = pneg %p230
        %p556 = pneg %p259
        %p557 = pneg %p256
        %s558 = sand.u32 %s246, 1
        %s559 = scalar_lea.sflag [#allocation8], %s558
        %s560 = sand.u32 %s246, 1
        %s561 = scalar_lea.vmem [#allocation7], %s560
        %p562 = scmp.lt.s32.totalorder %s27, 1
        %s563 = scalar_select %p562, %s27, 1
        %s564 = scalar_lea.vmem %s1, %s563
        %s565 = smul.u32 16, %s28
        %p566 = scmp.lt.s32.totalorder %s565, 47
        %s567 = scalar_select %p566, %s565, 47
        %s568 = smul.addr %s567, 8
        %s569 = scalar_lea.vmem %s2, %s568
        %s570 = smul.u32 16, %s28
        %p571 = scmp.lt.s32.totalorder %s27, 1
        %s572 = scalar_select %p571, %s27, 1
        %s573 = scalar_lea.vmem %s6, %s572
        %p574 = scmp.lt.s32.totalorder %s27, 1
        %s575 = scalar_select %p574, %s27, 1
        %s576 = scalar_lea.vmem %s7, %s575
        %p578 = scmp.eq.s32.totalorder %s28, 0
        // Predicated region
        $region170: #{tpu_custom_call.1} parent=156 // pred_check
          %p579 = pneg %p578
        $region171: #{tpu_custom_call.1} parent=156 // pred_check_branch
          %581 = sbr.rel (%p579) target = $region173
        $region172: #{tpu_custom_call.1} parent=156 // pred_region
          %582 = vst [vmem:[#allocation2] sm:$0xff] 0.0
          %583 = vst [vmem:[#allocation2 + $0x8] sm:$0xff] 0.0
          %584 = vst [vmem:[#allocation2 + $0x10] sm:$0xff] 0.0
          %585 = vst [vmem:[#allocation2 + $0x18] sm:$0xff] 0.0
          %586 = vst [vmem:[#allocation2 + $0x20] sm:$0xff] 0.0
        $region173: #{tpu_custom_call.1} parent=156 // pred_fallthru
          _
        %v587 = vld [vmem:[%s569] sm:$0xff]
        %v588 = vld [vmem:[%s569 + $0x8] sm:$0xff]
        %v589 = vld [vmem:[%s569 + $0x10] sm:$0xff]
        %v590 = vld [vmem:[%s569 + $0x18] sm:$0xff]
        %v591 = vld [vmem:[%s569 + $0x20] sm:$0xff]
        %v592 = vld [vmem:[%s569 + $0x28] sm:$0xff]
        %v593 = vld [vmem:[%s569 + $0x30] sm:$0xff]
        %v594 = vld [vmem:[%s569 + $0x38] sm:$0xff]
        %v595 = vld [vmem:[%s569 + $0x40] sm:$0xff]
        %v596 = vld [vmem:[%s569 + $0x48] sm:$0xff]
        %v597 = vld [vmem:[%s569 + $0x50] sm:$0xff]
        %v598 = vld [vmem:[%s569 + $0x58] sm:$0xff]
        %v599 = vld [vmem:[%s569 + $0x60] sm:$0xff]
        %v600 = vld [vmem:[%s569 + $0x68] sm:$0xff]
        %v601 = vld [vmem:[%s569 + $0x70] sm:$0xff]
        %v602 = vld [vmem:[%s569 + $0x78] sm:$0xff]
        %v603 = vld [vmem:[%s564] sm:$0x1]
        %604 = vset.pattern.permute.xlu0 0
        %605 = vperm.xlu0 %604, %v587
        %v606 = vpop.permute.xlu0 %605
        %607 = vset.pattern.permute.xlu0 0
        %608 = vperm.xlu0 %607, %v588
        %v609 = vpop.permute.xlu0 %608
        %610 = vset.pattern.permute.xlu0 0
        %611 = vperm.xlu0 %610, %v589
        %v612 = vpop.permute.xlu0 %611
        %613 = vset.pattern.permute.xlu0 0
        %614 = vperm.xlu0 %613, %v590
        %v615 = vpop.permute.xlu0 %614
        %616 = vset.pattern.permute.xlu0 0
        %617 = vperm.xlu0 %616, %v591
        %v618 = vpop.permute.xlu0 %617
        %619 = vset.pattern.permute.xlu0 0
        %620 = vperm.xlu0 %619, %v592
        %v621 = vpop.permute.xlu0 %620
        %622 = vset.pattern.permute.xlu0 0
        %623 = vperm.xlu0 %622, %v593
        %v624 = vpop.permute.xlu0 %623
        %625 = vset.pattern.permute.xlu0 0
        %626 = vperm.xlu0 %625, %v594
        %v627 = vpop.permute.xlu0 %626
        %628 = vset.pattern.permute.xlu0 0
        %629 = vperm.xlu0 %628, %v595
        %v630 = vpop.permute.xlu0 %629
        %631 = vset.pattern.permute.xlu0 0
        %632 = vperm.xlu0 %631, %v596
        %v633 = vpop.permute.xlu0 %632
        %634 = vset.pattern.permute.xlu0 0
        %635 = vperm.xlu0 %634, %v597
        %v636 = vpop.permute.xlu0 %635
        %637 = vset.pattern.permute.xlu0 0
        %638 = vperm.xlu0 %637, %v598
        %v639 = vpop.permute.xlu0 %638
        %640 = vset.pattern.permute.xlu0 0
        %641 = vperm.xlu0 %640, %v599
        %v642 = vpop.permute.xlu0 %641
        %643 = vset.pattern.permute.xlu0 0
        %644 = vperm.xlu0 %643, %v600
        %v645 = vpop.permute.xlu0 %644
        %646 = vset.pattern.permute.xlu0 0
        %647 = vperm.xlu0 %646, %v601
        %v648 = vpop.permute.xlu0 %647
        %649 = vset.pattern.permute.xlu0 0
        %650 = vperm.xlu0 %649, %v602
        %v651 = vpop.permute.xlu0 %650
        %v652 = vlaneseq
        %v653 = vshrl.u32 %v652, 7
        %v654 = vsub.s32 0, %v653
        %v655 = vrot.slane %v603, %v654
        %vm656 = vcmp.eq.s32.totalorder %v606, %v655
        %vm657 = vcmp.eq.s32.totalorder %v609, %v655
        %vm658 = vcmp.eq.s32.totalorder %v612, %v655
        %vm659 = vcmp.eq.s32.totalorder %v615, %v655
        %vm660 = vcmp.eq.s32.totalorder %v618, %v655
        %vm661 = vcmp.eq.s32.totalorder %v621, %v655
        %vm662 = vcmp.eq.s32.totalorder %v624, %v655
        %vm663 = vcmp.eq.s32.totalorder %v627, %v655
        %vm664 = vcmp.eq.s32.totalorder %v630, %v655
        %vm665 = vcmp.eq.s32.totalorder %v633, %v655
        %vm666 = vcmp.eq.s32.totalorder %v636, %v655
        %vm667 = vcmp.eq.s32.totalorder %v639, %v655
        %vm668 = vcmp.eq.s32.totalorder %v642, %v655
        %vm669 = vcmp.eq.s32.totalorder %v645, %v655
        %vm670 = vcmp.eq.s32.totalorder %v648, %v655
        %vm671 = vcmp.eq.s32.totalorder %v651, %v655
        %v672 = vsel %vm656, 1, 0
        %v673 = vsel %vm657, 1, 0
        %v674 = vsel %vm658, 1, 0
        %v675 = vsel %vm659, 1, 0
        %v676 = vsel %vm660, 1, 0
        %v677 = vsel %vm661, 1, 0
        %v678 = vsel %vm662, 1, 0
        %v679 = vsel %vm663, 1, 0
        %v680 = vsel %vm664, 1, 0
        %v681 = vsel %vm665, 1, 0
        %v682 = vsel %vm666, 1, 0
        %v683 = vsel %vm667, 1, 0
        %v684 = vsel %vm668, 1, 0
        %v685 = vsel %vm669, 1, 0
        %v686 = vsel %vm670, 1, 0
        %v687 = vsel %vm671, 1, 0
        %v688 = vcvt.s32.f32 %v672
        %v689 = vcvt.s32.f32 %v673
        %v690 = vcvt.s32.f32 %v674
        %v691 = vcvt.s32.f32 %v675
        %v692 = vcvt.s32.f32 %v676
        %v693 = vcvt.s32.f32 %v677
        %v694 = vcvt.s32.f32 %v678
        %v695 = vcvt.s32.f32 %v679
        %v696 = vcvt.s32.f32 %v680
        %v697 = vcvt.s32.f32 %v681
        %v698 = vcvt.s32.f32 %v682
        %v699 = vcvt.s32.f32 %v683
        %v700 = vcvt.s32.f32 %v684
        %v701 = vcvt.s32.f32 %v685
        %v702 = vcvt.s32.f32 %v686
        %v703 = vcvt.s32.f32 %v687
        %v704 = vpack.c.bf16 %v689, %v688
        %v705 = vpack.c.bf16 %v691, %v690
        %v706 = vpack.c.bf16 %v693, %v692
        %v707 = vpack.c.bf16 %v695, %v694
        %v708 = vpack.c.bf16 %v697, %v696
        %v709 = vpack.c.bf16 %v699, %v698
        %v710 = vpack.c.bf16 %v701, %v700
        %v711 = vpack.c.bf16 %v703, %v702
        %v712 = vld [vmem:[#allocation2] sm:$0xff]
        %v713 = vld [vmem:[#allocation2 + $0x8] sm:$0xff]
        %v714 = vld [vmem:[#allocation2 + $0x10] sm:$0xff]
        %v715 = vld [vmem:[#allocation2 + $0x18] sm:$0xff]
        %v716 = vld [vmem:[#allocation2 + $0x20] sm:$0xff]
        %v717 = vld [vmem:[%s496] sm:$0xf]
        %v718 = vld [vmem:[%s496 + $0x4] sm:$0xf]
        %v719 = vld [vmem:[%s496 + $0x8] sm:$0xf]
        %v720 = vld [vmem:[%s496 + $0xc] sm:$0xf]
        %v721 = vld [vmem:[%s496 + $0x10] sm:$0xf]
        %v727 = vunpack.c.l.b16 %v717
        %v728 = vunpack.c.l.b16 %v718
        %v729 = vunpack.c.l.b16 %v719
        %v730 = vunpack.c.l.b16 %v720
        %v731 = vunpack.c.l.b16 %v721
        %v732 = vpack.c.b16 %v728, %v727
        %v733 = vpack.c.b16 %v730, %v729
        %v734 = vpack.c.b16 %v731, %v731
        %738 = vmatprep.subr.bf16.mxu0 0
        %739 = vmatpush1.bf16.msra.mxu0 %v704
        %740 = vmatprep.subr.bf16.mxu0 0
        %741 = vmatpush1.bf16.msra.mxu0 %v705
        %742 = vmatprep.subr.bf16.mxu0 0
        %743 = vmatpush1.bf16.msra.mxu0 %v706
        %744 = vmatprep.subr.bf16.mxu0 0
        %745 = vmatpush1.bf16.msra.mxu0 %v707
        %746 = vmatprep.subr.bf16.mxu0 0
        %747 = vmatpush1.bf16.msra.mxu0 %v708
        %748 = vmatprep.subr.bf16.mxu0 0
        %749 = vmatpush1.bf16.msra.mxu0 %v709
        %750 = vmatprep.subr.bf16.mxu0 0
        %751 = vmatpush1.bf16.msra.mxu0 %v710
        %752 = vmatprep.subr.bf16.mxu0 0
        %753 = vmatpush1.bf16.msra.mxu0 %v711
        %754 = vmatprep.subr.bf16.mxu0 0
        %755 = vmatpush1.bf16.msra.mxu0 0
        %756 = vmatprep.subr.bf16.mxu0 0
        %757 = vmatpush1.bf16.msra.mxu0 0
        %758 = vmatprep.subr.bf16.mxu0 0
        %759 = vmatpush1.bf16.msra.mxu0 0
        %760 = vmatprep.subr.bf16.mxu0 0
        %761 = vmatpush1.bf16.msra.mxu0 0
        %762 = vmatprep.subr.bf16.mxu0 0
        %763 = vmatpush1.bf16.msra.mxu0 0
        %764 = vmatprep.subr.bf16.mxu0 0
        %765 = vmatpush1.bf16.msra.mxu0 0
        %766 = vmatprep.subr.bf16.mxu0 0
        %767 = vmatpush1.bf16.msra.mxu0 0
        %768 = vmatprep.subr.bf16.mxu0 0
        %769 = vmatpush1.bf16.msra.mxu0 0
        %770 = vmatprep.mubr.bf16.mxu0 0
        %771 = vmatmul.mubr.bf16.gmra.mrb[0].mxu0 %v732
        %v772 = vpop.f32.mrb[0].mxu0
        %v773 = vadd.f32 0.0, %v772
        %v774 = vpop.f32.mrb[0].mxu0
        %v775 = vpop.f32.mrb[0].mxu0
        %v776 = vadd.f32 0.0, %v775
        %v777 = vpop.f32.mrb[0].mxu0
        %778 = vmatprep.mubr.bf16.mxu0 0
        %779 = vmatmul.mubr.bf16.gmra.mrb[0].mxu0 %v733
        %v780 = vpop.f32.mrb[0].mxu0
        %v781 = vadd.f32 0.0, %v780
        %v782 = vpop.f32.mrb[0].mxu0
        %v783 = vpop.f32.mrb[0].mxu0
        %v784 = vadd.f32 0.0, %v783
        %v785 = vpop.f32.mrb[0].mxu0
        %786 = vmatprep.mubr.bf16.mxu0 0
        %787 = vmatmul.mubr.bf16.gmra.mrb[0].mxu0 %v734
        %v788 = vpop.f32.mrb[0].mxu0
        %v789 = vadd.f32 0.0, %v788
        %v790 = vpop.f32.mrb[0].mxu0
        %v791 = vpop.f32.mrb[0].mxu0
        %v792 = vpop.f32.mrb[0].mxu0
        %793 = vdwg.mxu0
        %v794 = vadd.f32 %v712, %v773
        %v795 = vadd.f32 %v713, %v776
        %v796 = vadd.f32 %v714, %v781
        %v797 = vadd.f32 %v715, %v784
        %v798 = vadd.f32 %v716, %v789
        %799 = vst [vmem:[#allocation2] sm:$0xff] %v794
        %800 = vst [vmem:[#allocation2 + $0x8] sm:$0xff] %v795
        %801 = vst [vmem:[#allocation2 + $0x10] sm:$0xff] %v796
        %802 = vst [vmem:[#allocation2 + $0x18] sm:$0xff] %v797
        %803 = vst [vmem:[#allocation2 + $0x20] sm:$0xff] %v798
        %p804 = scmp.eq.s32.totalorder %s28, 2
        // Predicated region
        $region174: #{tpu_custom_call.1} parent=156 // pred_check
          %p805 = pneg %p804
        $region175: #{tpu_custom_call.1} parent=156 // pred_check_branch
          %807 = sbr.rel (%p805) target = $region177
        $region176: #{tpu_custom_call.1} parent=156 // pred_region
          %v808 = vld [vmem:[#allocation2] sm:$0xff]
          %v809 = vld [vmem:[#allocation2 + $0x8] sm:$0xff]
          %v810 = vld [vmem:[#allocation2 + $0x10] sm:$0xff]
          %v811 = vld [vmem:[#allocation2 + $0x18] sm:$0xff]
          %v812 = vld [vmem:[#allocation2 + $0x20] sm:$0xff]
          %vm813 = vcmp.gt.f32.partialorder %v812, 0.0
          %v814 = vrsqrt.pop %v812
          %v815 = vsel %vm813, %v814, 0.0
          %v816 = vld [vmem:[%s510] sm:$0xff]
          %v817 = vld [vmem:[%s510 + $0x8] sm:$0xff]
          %v818 = vld [vmem:[%s510 + $0x10] sm:$0xff]
          %v819 = vld [vmem:[%s510 + $0x18] sm:$0xff]
          %v820 = vld [vmem:[%s510 + $0x20] sm:$0xff]
          %v821 = vld [vmem:[%s503] sm:$0xff]
          %v822 = vld [vmem:[%s503 + $0x8] sm:$0xff]
          %v823 = vld [vmem:[%s503 + $0x10] sm:$0xff]
          %v824 = vld [vmem:[%s503 + $0x18] sm:$0xff]
          %v825 = vld [vmem:[%s503 + $0x20] sm:$0xff]
          %v826 = vlaneseq
          %v827 = vshrl.u32 %v826, 7
          %v828 = vsub.s32 0, %v827
          %v829 = vrot.slane %v815, %v828
          %v830 = vmul.f32 %v829, %v808
          %v831 = vmul.f32 %v829, %v809
          %v832 = vmul.f32 %v829, %v810
          %v833 = vmul.f32 %v829, %v811
          %v834 = vmul.f32 %v829, %v812
          %v835 = vadd.f32 %v821, %v830
          %v836 = vadd.f32 %v822, %v831
          %v837 = vadd.f32 %v823, %v832
          %v838 = vadd.f32 %v824, %v833
          %v839 = vadd.f32 %v825, %v834
          %v840 = vmul.f32 %v816, %v835
          %v841 = vmul.f32 %v817, %v836
          %v842 = vmul.f32 %v818, %v837
          %v843 = vmul.f32 %v819, %v838
          %v844 = vmul.f32 %v820, %v839
          %v845 = vadd.f32 %v840, %v841
          %v846 = vadd.f32 %v845, %v842
          %v847 = vadd.f32 %v846, %v843
          %v848 = vadd.f32 %v847, %v844
          %v849 = vrot.slane %v848, 4
          %v850 = vadd.f32 %v848, %v849
          %v851 = vrot.slane %v850, 2
          %v852 = vadd.f32 %v850, %v851
          %v853 = vrot.slane %v852, 1
          %v854 = vadd.f32 %v852, %v853
          %v855 = vld [vmem:[%s573] sm:$0x1]
          %v856 = vadd.f32 %v854, %v855
          %v857 = vld [vmem:[%s576] sm:$0x1]
          %v858 = vadd.f32 %v856, %v857
          %s859 = sld [smem:[#allocation3]]
          %v860 = vstv %s859
          %v861 = vadd.f32 %v858, %v860
          %862 = vst [vmem:[%s561] sm:$0x1] %v861
        $region177: #{tpu_custom_call.1} parent=156 // pred_fallthru
          _
        %s863 = sand.u32 %s246, 1
        %s864 = scalar_lea.sflag [#allocation8], %s863
        %s865 = sand.u32 %s246, 1
        %s866 = scalar_lea.vmem [#allocation7], %s865
        // Predicated region
        $region178: #{tpu_custom_call.1} parent=156 // pred_check
          %p867 = pneg %p256
        $region179: #{tpu_custom_call.1} parent=156 // pred_check_branch
          %869 = sbr.rel (%p867) target = $region181
        $region180: #{tpu_custom_call.1} parent=156 // pred_region
          %s871 = ssub.s32 16, 16
          %872 = vsyncadd %s864, %s871
          %s873 = smul.addr %s27, 16
          %s874 = scalar_lea.hbm %s8, %s873
          %s876 = sshll.u32 %s866, 4
          %s877 = int_to_ptr.vmem [resolvable:$true] %s876
          %879 = dma.vmem_to_hbm [thread:$0]  %s877, 16, %s874, %s864
        $region181: #{tpu_custom_call.1} parent=156 // pred_fallthru
          _
      $region157: #{tpu_custom_call.1} parent=5 // pred_fallthru
        _
      %p880 = scmp.le.s32.totalorder 2, %s18
      // Predicated region
      $region182: #{tpu_custom_call.1} parent=5 // pred_check
        %p881 = pneg %p880
      $region183: #{tpu_custom_call.1} parent=5 // pred_check_branch
        %883 = sbr.rel (%p881) target = $region185
      $region184: #{tpu_custom_call.1} parent=5 // pred_region
        %s884 = ssub.s32 %s18, 2
        // Predicated region
        $region186: #{tpu_custom_call.1} parent=184 // pred_check
          %p885 = pneg %p262
        $region187: #{tpu_custom_call.1} parent=184 // pred_check_branch
          %887 = sbr.rel (%p885) target = $region189
        $region188: #{tpu_custom_call.1} parent=184 // pred_region
          %s888 = sand.u32 %s247, 1
          %s889 = scalar_lea.sflag [#allocation8], %s888
          %s890 = sand.u32 %s247, 1
          %s891 = scalar_lea.vmem [#allocation7], %s890
          %892 = dma.done %s889, 16
        $region189: #{tpu_custom_call.1} parent=184 // pred_fallthru
          _
      $region185: #{tpu_custom_call.1} parent=5 // pred_fallthru
        _
    $region6: #{tpu_custom_call.1} parent=1 // loop_footer
      %s22 = sadd.s32 1, %s18
    $region7: #{tpu_custom_call.1} parent=1 // loop_footer_branch
      %17 = sbr.rel target = $region3
    $region8: #{tpu_custom_call.1} parent=1 // loop_exit
      _
    %893 = vsyncpa [#allocation8], 1
    %s894 = scalar_lea.sflag [#allocation8], 1
    %895 = vsyncpa %s894, 1

</llo_original>
